<compile_context>
chip_gen: v6e
topology: v6e:2x2x1
jax: 0.10.0
libtpu: 0.0.40
codegen_flags: <defaults>
</compile_context>

<pallas_src>
import math

import jax
import jax.numpy as jnp
from jax.experimental import pallas as pl
from jax.experimental.pallas import tpu as pltpu


def _dyt_kernel(alpha_ref, x_ref, w_ref, b_ref, o_ref):
    # alpha_ref: SMEM (1,); x_ref/o_ref: (tm, tk); w_ref/b_ref: (1, tk).
    a = alpha_ref[0].astype(jnp.float32)
    x = x_ref[...].astype(jnp.float32)
    y = jnp.tanh(a * x)
    w = w_ref[...].astype(jnp.float32)
    b = b_ref[...].astype(jnp.float32)
    o_ref[...] = (y * w + b).astype(o_ref.dtype)


def _round_rows(tm, R):
    """Row tile: full R, or a multiple of 8 (ragged last block handled via cdiv)."""
    if tm >= R or R <= 8:
        return R
    tm = (tm // 8) * 8
    return max(tm, 8)


def _round_lanes(tk, K):
    """Lane tile: full K, or a multiple of 128 (ragged last block handled via cdiv)."""
    if tk >= K:
        return K
    tk = (tk // 128) * 128
    return max(tk, 128)


def _choose_tiles(R, K, itemsize):
    # ~2 MiB of x per block -> in+out double-buffered ~8 MiB: safe on v5e (16 MiB
    # default scoped), v6e (32 MiB) and v7x (32 MiB scoped / 64 MiB physical).
    target_elems = (2 * 1024 * 1024) // itemsize
    tk = _round_lanes(min(K, max(512, target_elems // max(R, 1))), K)
    tm = _round_rows(max(1, target_elems // tk), R)
    return tm, tk


def _dyt_2d(x2d, alpha, w_k, b_k):
    """Apply DyT on an (R, K) slab; w_k/b_k have shape (K,), alpha is a scalar array."""
    R, K = x2d.shape
    tm, tk = _choose_tiles(R, K, x2d.dtype.itemsize)
    grid = (pl.cdiv(R, tm), pl.cdiv(K, tk))

    alpha1 = jnp.asarray(alpha, jnp.float32).reshape(1)
    w2 = w_k.reshape(1, K)
    b2 = b_k.reshape(1, K)

    n = R * K
    itemsize = x2d.dtype.itemsize
    cost = pl.CostEstimate(
        flops=3 * n,                      # scale-mul + affine mul/add (tanh counted below)
        transcendentals=n,                # one tanh per element
        bytes_accessed=2 * n * itemsize + 2 * K * w2.dtype.itemsize,
    )

    return pl.pallas_call(
        _dyt_kernel,
        out_shape=jax.ShapeDtypeStruct((R, K), x2d.dtype),
        grid=grid,
        in_specs=[
            pl.BlockSpec(memory_space=pltpu.MemorySpace.SMEM),    # alpha (scalar path)
            pl.BlockSpec((tm, tk), lambda i, j: (i, j)),          # x tile
            pl.BlockSpec((1, tk), lambda i, j: (0, j)),           # weight row (broadcast over i)
            pl.BlockSpec((1, tk), lambda i, j: (0, j)),           # bias row   (broadcast over i)
        ],
        out_specs=pl.BlockSpec((tm, tk), lambda i, j: (i, j)),
        compiler_params=pltpu.CompilerParams(
            dimension_semantics=("parallel", "parallel"),
            vmem_limit_bytes=32 * 1024 * 1024,
        ),
        cost_estimate=cost,
    )(alpha1, x2d, w2, b2)


def _densify_channels_last(x, weight, bias):
    """View (..., C) as a lane-dense (R, L) slab when possible (L multiple of 128)."""
    C = weight.shape[0]
    T = x.size
    if C % 128 == 0:
        return x.reshape(-1, C), weight, bias
    L = (C * 128) // math.gcd(C, 128)   # lcm(C, 128)
    if L <= 4096 and T % L == 0:
        reps = L // C
        return x.reshape(-1, L), jnp.tile(weight, reps), jnp.tile(bias, reps)
    # Fallback: correct but not lane-dense (C stays on the lane axis).
    return x.reshape(-1, C), weight, bias


def dynamic_tanh(x, alpha, weight, bias, *, channels_last=True):
    """JAX/Pallas equivalent of DynamicTanh.forward.

    channels_last=True : x has shape (..., C) with C == weight.shape[0]
    channels_last=False: x has shape (N, C, H, W) with C == weight.shape[0]
    """
    C = weight.shape[0]
    if channels_last:
        assert x.shape[-1] == C, "channels_last expects x[..., C]"
        orig_shape = x.shape
        x2d, w_k, b_k = _densify_channels_last(x, weight, bias)
        y2d = _dyt_2d(x2d, alpha, w_k, b_k)
        return y2d.reshape(orig_shape)
    else:
        # NCHW: no transposes. View as (N, C*H*W) and expand weight/bias per element.
        N, Cx, H, W = x.shape
        assert Cx == C, "channels_first expects x[N, C, H, W]"
        HW = H * W
        x2d = x.reshape(N, C * HW)            # pure view, no HBM round-trip
        w_k = jnp.repeat(weight, HW)          # size C*H*W, tiny vs. x
        b_k = jnp.repeat(bias, HW)
        y2d = _dyt_2d(x2d, alpha, w_k, b_k)
        return y2d.reshape(N, C, H, W)


def _reference(x, alpha, weight, bias, *, channels_last=True):
    y = jnp.tanh(alpha * x)
    if channels_last:
        return y * weight + bias
    else:
        return y * weight[:, None, None] + bias[:, None, None]


if __name__ == "__main__":
    key = jax.random.PRNGKey(0)
    k1, k2 = jax.random.split(key)

    alpha_init_value = 0.5

    # ---- channels_last: normalized_shape = hidden = 32, x: (batch=2, seq=8, hidden=32) ----
    C_last = 32
    alpha_l = jnp.full((1,), alpha_init_value, dtype=jnp.float32)
    weight_l = jnp.ones((C_last,), jnp.float32) + 0.01 * jnp.arange(C_last, dtype=jnp.float32)
    bias_l = jnp.zeros((C_last,), jnp.float32) + 0.001 * jnp.arange(C_last, dtype=jnp.float32)
    x_last = jax.random.normal(k1, (2, 8, C_last), dtype=jnp.float32)

    y_last = jax.block_until_ready(
        dynamic_tanh(x_last, alpha_l, weight_l, bias_l, channels_last=True)
    )
    ref_last = _reference(x_last, alpha_l, weight_l, bias_l, channels_last=True)
    assert y_last.shape == x_last.shape
    assert jnp.allclose(y_last, ref_last, atol=1e-5, rtol=1e-5), "channels_last mismatch"

    # ---- channels_first: normalized_shape = channels = 4, x: NCHW (2, 4, 16, 16) ----
    C_first = 4
    alpha_f = jnp.full((1,), alpha_init_value, dtype=jnp.float32)
    weight_f = jnp.ones((C_first,), jnp.float32) + 0.1 * jnp.arange(C_first, dtype=jnp.float32)
    bias_f = jnp.zeros((C_first,), jnp.float32) + 0.05 * jnp.arange(C_first, dtype=jnp.float32)
    x_first = jax.random.normal(k2, (2, C_first, 16, 16), dtype=jnp.float32)

    y_first = jax.block_until_ready(
        dynamic_tanh(x_first, alpha_f, weight_f, bias_f, channels_last=False)
    )
    ref_first = _reference(x_first, alpha_f, weight_f, bias_f, channels_last=False)
    assert y_first.shape == x_first.shape
    assert jnp.allclose(y_first, ref_first, atol=1e-5, rtol=1e-5), "channels_first mismatch"

    print("KERNEL_OK")
</pallas_src>

<mosaic_0001>
module attributes {stable_mosaic.version = 11 : i64} {
  func.func @_dyt_kernel(%arg0: i32, %arg1: i32, %arg2: memref<1xf32, #tpu.memory_space<smem>>, %arg3: memref<4x128xf32, #tpu.memory_space<vmem>>, %arg4: memref<1x128xf32, #tpu.memory_space<vmem>>, %arg5: memref<1x128xf32, #tpu.memory_space<vmem>>, %arg6: memref<4x128xf32, #tpu.memory_space<vmem>>) attributes {dimension_semantics = [#tpu.dimension_semantics<parallel>, #tpu.dimension_semantics<parallel>], iteration_bounds = array<i64: 1, 1>, scalar_prefetch = 0 : i64, scratch_operands = 0 : i64, tpu.core_type = #tpu.core_type<tc>, window_params = [{transform_indices = @transform_0, window_bounds = array<i64: 1>}, {transform_indices = @transform_1, window_bounds = array<i64: 4, 128>}, {transform_indices = @transform_2, window_bounds = array<i64: 1, 128>}, {transform_indices = @transform_3, window_bounds = array<i64: 1, 128>}, {transform_indices = @transform_4, window_bounds = array<i64: 4, 128>}]} {
    %c0 = arith.constant 0 : index
    %0 = memref.load %arg2[%c0] : memref<1xf32, #tpu.memory_space<smem>>
    %c0_0 = arith.constant 0 : index
    %c0_1 = arith.constant 0 : index
    %1 = vector.load %arg3[%c0_0, %c0_1] : memref<4x128xf32, #tpu.memory_space<vmem>>, vector<4x128xf32>
    %2 = vector.broadcast %0 : f32 to vector<4x128xf32>
    %3 = arith.mulf %2, %1 : vector<4x128xf32>
    %4 = math.tanh %3 : vector<4x128xf32>
    %c0_2 = arith.constant 0 : index
    %c0_3 = arith.constant 0 : index
    %5 = vector.load %arg4[%c0_2, %c0_3] : memref<1x128xf32, #tpu.memory_space<vmem>>, vector<1x128xf32>
    %c0_4 = arith.constant 0 : index
    %c0_5 = arith.constant 0 : index
    %6 = vector.load %arg5[%c0_4, %c0_5] : memref<1x128xf32, #tpu.memory_space<vmem>>, vector<1x128xf32>
    %7 = vector.broadcast %5 : vector<1x128xf32> to vector<4x128xf32>
    %8 = arith.mulf %4, %7 : vector<4x128xf32>
    %9 = vector.broadcast %6 : vector<1x128xf32> to vector<4x128xf32>
    %10 = arith.addf %8, %9 : vector<4x128xf32>
    %c0_6 = arith.constant 0 : index
    %c0_7 = arith.constant 0 : index
    %11 = vector.load %arg6[%c0_6, %c0_7] : memref<4x128xf32, #tpu.memory_space<vmem>>, vector<4x128xf32>
    tpu.vector_store %arg6[%c0_6, %c0_7], %10 {strides = array<i32>} : memref<4x128xf32, #tpu.memory_space<vmem>>, vector<4x128xf32>,
    return
  }
  func.func @transform_0(%arg0: i32, %arg1: i32) -> i32 {
    %c0_i32 = arith.constant 0 : i32
    %c0_i32_0 = arith.constant 0 : i32
    return %c0_i32 : i32
  }
  func.func @transform_1(%arg0: i32, %arg1: i32) -> (i32, i32) {
    %c0_i32 = arith.constant 0 : i32
    return %arg0, %arg1 : i32, i32
  }
  func.func @transform_2(%arg0: i32, %arg1: i32) -> (i32, i32) {
    %c0_i32 = arith.constant 0 : i32
    %c0_i32_0 = arith.constant 0 : i32
    return %c0_i32, %arg1 : i32, i32
  }
  func.func @transform_3(%arg0: i32, %arg1: i32) -> (i32, i32) {
    %c0_i32 = arith.constant 0 : i32
    %c0_i32_0 = arith.constant 0 : i32
    return %c0_i32, %arg1 : i32, i32
  }
  func.func @transform_4(%arg0: i32, %arg1: i32) -> (i32, i32) {
    %c0_i32 = arith.constant 0 : i32
    return %arg0, %arg1 : i32, i32
  }
}

</mosaic_0001>

<llo_original>
// kernel: tpu_custom_call.1
$region0: #{tpu_custom_call.1}
  #allocation0 [shape = 'u32[]', space=smem, size = 0x4, offset = 0x4, fixed_abs, tag = 'smem constant byte address 0x4 - core index']
  #allocation1 [shape = 'u32[144,128]{1,0:T(1,128)}', space=vmem, size = 0x12000, scoped, tag = 'internal scratch']
  #allocation2 [shape = 'f32[1]{0:T(128)S(6)}', space=smem, size = 0x200, scoped, tag = 'scoped memory for tpu_custom_call.1']
  %s0 = inlined_call_operand.<no memory space> [shape: f32[1], index: 0, kind: input, shape index: {}]
  %s1 = inlined_call_operand.hbm [shape: f32[4,128], index: 1, kind: input, shape index: {}]
  %s2 = inlined_call_operand.vmem [shape: f32[1,128], index: 2, kind: input, shape index: {}]
  %s3 = inlined_call_operand.vmem [shape: f32[1,128], index: 3, kind: input, shape index: {}]
  %s4 = inlined_call_operand.hbm [shape: f32[4,128], index: 4, kind: output, shape index: {}]
  %s5 = sld [smem:[#allocation0]]
  $region30: #{tpu_custom_call.1} parent=0
    _
  %s7 = ssub.s32 1, %s5
  %s8 = scalar_select 0, %s7, %s5
  %9 = sst [smem:[#allocation2]] %s0
  $region1: #{tpu_custom_call.1} parent=0
    #allocation3 [shape = 'u8[2048]{0}', space=vmem, size = 0x800, scoped, tag = 'input window, operand 1, single buffered']
    #allocation4 [shape = 's32[1]{0}', space=sflag, size = 0x4, scoped, tag = 'scoped memory for tpu_custom_call.1']
    #allocation5 [shape = 's32[1]{0}', space=sflag, size = 0x4, scoped, tag = 'scoped memory for tpu_custom_call.1']
    #allocation6 [shape = 'u8[2048]{0}', space=vmem, size = 0x800, scoped, tag = 'output window, operand 0, single buffered']
    %10 = vsyncpa [#allocation4], 0
    %11 = vsyncpa [#allocation5], 0
    // Predicated region
    $region2: #{tpu_custom_call.1} parent=1 // pred_check
      _
    $region3: #{tpu_custom_call.1} parent=1 // pred_check_branch
      %13 = sbr.rel (0) target = $region5
    $region4: #{tpu_custom_call.1} parent=1 // pred_region
      _
    $region5: #{tpu_custom_call.1} parent=1 // pred_fallthru
      _
    // Predicated region
    $region6: #{tpu_custom_call.1} parent=1 // pred_check
      _
    $region7: #{tpu_custom_call.1} parent=1 // pred_check_branch
      %15 = sbr.rel (0) target = $region9
    $region8: #{tpu_custom_call.1} parent=1 // pred_region
      %s17 = ssub.s32 64, 64
      %18 = vsyncadd [#allocation4], %s17
      %s20 = sshll.u32 [#allocation3], 4
      %s21 = int_to_ptr.vmem [resolvable:$true] %s20
      %23 = dma.hbm_to_vmem [thread:$0]  %s1, 64, %s21, [#allocation4]
    $region9: #{tpu_custom_call.1} parent=1 // pred_fallthru
      _
    // Predicated region
    $region10: #{tpu_custom_call.1} parent=1 // pred_check
      _
    $region11: #{tpu_custom_call.1} parent=1 // pred_check_branch
      %25 = sbr.rel (0) target = $region13
    $region12: #{tpu_custom_call.1} parent=1 // pred_region
      _
    $region13: #{tpu_custom_call.1} parent=1 // pred_fallthru
      _
    // Predicated region
    $region14: #{tpu_custom_call.1} parent=1 // pred_check
      _
    $region15: #{tpu_custom_call.1} parent=1 // pred_check_branch
      %27 = sbr.rel (0) target = $region17
    $region16: #{tpu_custom_call.1} parent=1 // pred_region
      _
    $region17: #{tpu_custom_call.1} parent=1 // pred_fallthru
      _
    // Predicated region
    $region18: #{tpu_custom_call.1} parent=1 // pred_check
      _
    $region19: #{tpu_custom_call.1} parent=1 // pred_check_branch
      %29 = sbr.rel (0) target = $region21
    $region20: #{tpu_custom_call.1} parent=1 // pred_region
      %30 = dma.done [#allocation4], 64
    $region21: #{tpu_custom_call.1} parent=1 // pred_fallthru
      _
    %s31 = sld [smem:[#allocation2]]
    %v32 = vld [vmem:[#allocation3] sm:$0xf]
    %v33 = vstv %s31
    %v34 = vmul.f32 %v33, %v32
    %v35 = vtanh.pop %v34
    %v36 = vld [vmem:[%s2] sm:$0x1]
    %v37 = vld [vmem:[%s3] sm:$0x1]
    %v39 = vlaneseq
    %v40 = vshrl.u32 %v39, 7
    %v41 = vsub.s32 0, %v40
    %v42 = vrot.slane %v36, %v41
    %v44 = vmul.f32 %v35, %v42
    %v46 = vlaneseq
    %v47 = vshrl.u32 %v46, 7
    %v48 = vsub.s32 0, %v47
    %v49 = vrot.slane %v37, %v48
    %v51 = vadd.f32 %v44, %v49
    %52 = vst [vmem:[#allocation6] sm:$0xf] %v51
    // Predicated region
    $region22: #{tpu_custom_call.1} parent=1 // pred_check
      _
    $region23: #{tpu_custom_call.1} parent=1 // pred_check_branch
      %54 = sbr.rel (0) target = $region25
    $region24: #{tpu_custom_call.1} parent=1 // pred_region
      %s56 = ssub.s32 64, 64
      %57 = vsyncadd [#allocation5], %s56
      %s59 = sshll.u32 [#allocation6], 4
      %s60 = int_to_ptr.vmem [resolvable:$true] %s59
      %62 = dma.vmem_to_hbm [thread:$0]  %s60, 64, %s4, [#allocation5]
    $region25: #{tpu_custom_call.1} parent=1 // pred_fallthru
      _
    // Predicated region
    $region26: #{tpu_custom_call.1} parent=1 // pred_check
      _
    $region27: #{tpu_custom_call.1} parent=1 // pred_check_branch
      %64 = sbr.rel (0) target = $region29
    $region28: #{tpu_custom_call.1} parent=1 // pred_region
      %65 = dma.done [#allocation5], 64
    $region29: #{tpu_custom_call.1} parent=1 // pred_fallthru
      _
    %66 = vsyncpa [#allocation4], 1
    %67 = vsyncpa [#allocation5], 1

</llo_original>
